<compile_context>
chip_gen: v7x
topology: tpu7x:2x2x1
jax: 0.10.0
libtpu: 0.0.40
codegen_flags: <defaults>
</compile_context>

<pallas_src>
import functools
import math
from typing import NamedTuple, Optional

import jax
import jax.numpy as jnp
from jax.experimental import pallas as pl
from jax.experimental.pallas import tpu as pltpu


# ---------------------------------------------------------------------------
# Kernel
# ---------------------------------------------------------------------------
def prompt_aggr_kernel(x_ref, mask_ref, kq_ref, expand_ref,
                       w1_ref, b1_ref, w2_ref, b2_ref,
                       wv_ref, bv_ref, wo_ref, bo_ref,
                       gamma_ref, beta_ref,
                       out_ref, score_ref, *, score_head_i, lane_dense_score):
    Bblk, S, E = x_ref.shape
    H = kq_ref.shape[1]
    n = Bblk * S
    cdt = w1_ref.dtype          # matmul operand dtype (bfloat16 by default)
    f32 = jnp.float32

    # NOTE: when S is a multiple of 8 these reshapes only merge/split leading
    # (sublane) dims of (rows, lanes) tiles and are layout no-ops.
    x2 = x_ref[...].reshape(n, E)                                    # (n, E) cdt

    # ---- MLP: Linear -> ReLU -> Linear, all Bblk*S tokens at once ----
    h = jnp.dot(x2, w1_ref[...], preferred_element_type=f32) + b1_ref[...]
    h = jnp.maximum(h, 0.0)
    h = jnp.dot(h.astype(cdt), w2_ref[...], preferred_element_type=f32) + b2_ref[...]
    hc = h.astype(cdt)

    # ---- value projection + folded per-head attention logits ----
    v = jnp.dot(hc, wv_ref[...], preferred_element_type=f32) + bv_ref[...]   # (n, E)
    s = jnp.dot(hc, kq_ref[...], preferred_element_type=f32)                 # (n, H)

    # ---- masked softmax over each batch element's S keys, per head ----
    s3 = s.reshape(Bblk, S, H)
    valid = mask_ref[...] > 0                                        # (Bblk, S, 1)
    s3 = jnp.where(valid, s3, -jnp.inf)
    m = jnp.max(s3, axis=1, keepdims=True)                           # per-segment max
    p3 = jnp.exp(s3 - m)
    denom = jnp.sum(p3, axis=1, keepdims=True)                       # (Bblk, 1, H)
    # A fully-masked element gives denom == 0 -> NaN, matching PyTorch softmax
    # over a row of -inf.
    p3 = p3 * pl.reciprocal(denom, approx=True)                      # normalized probs

    # Only the head the module actually returns is written out.
    if lane_dense_score:
        score_ref[...] = p3[:, :, score_head_i]                      # (Bblk, S)
    else:
        score_ref[...] = p3[:, :, score_head_i:score_head_i + 1]     # (Bblk, S, 1)

    # ---- weighted sum of values ----
    # Expand per-head probs to the E lanes (tiny 0/1 matmul), multiply by V and
    # segment-sum over each element's S keys with a sublane reduction.
    p_lanes = jnp.dot(p3.reshape(n, H), expand_ref[...],
                      preferred_element_type=f32)                    # (n, E)
    attn = jnp.sum((p_lanes * v).reshape(Bblk, S, E), axis=1)        # (Bblk, E)

    # ---- output projection + LayerNorm (eps = 1e-5, PyTorch default) ----
    o = jnp.dot(attn.astype(cdt), wo_ref[...], preferred_element_type=f32) + bo_ref[...]
    mu = jnp.mean(o, axis=-1, keepdims=True)
    var = jnp.mean(jnp.square(o - mu), axis=-1, keepdims=True)
    out_ref[...] = (o - mu) * jax.lax.rsqrt(var + 1e-5) * gamma_ref[...] + beta_ref[...]


# ---------------------------------------------------------------------------
# One-time parameter preparation (PyTorch layout -> kernel layout)
# ---------------------------------------------------------------------------
def prepare_params(raw, num_heads, matmul_dtype=jnp.bfloat16):
    """Transposes, in_proj slicing, K-projection fold and the batch-independent
    prompt-query projection, done once on the host."""
    f32 = jnp.float32
    mm = matmul_dtype
    E = raw["w1"].shape[0]
    head_dim = E // num_heads

    in_w = jnp.asarray(raw["in_proj_weight"], f32)
    in_b = jnp.asarray(raw["in_proj_bias"], f32)
    wq, wk, wv = in_w[:E], in_w[E:2 * E], in_w[2 * E:]
    bq, bv = in_b[:E], in_b[2 * E:]
    # The key bias bk only shifts each head's logits by a constant; softmax is
    # shift invariant per (batch, head), so it is dropped from the logit path.

    q = jnp.asarray(raw["prompt_query"], f32) @ wq.T + bq            # (E,)
    scale = 1.0 / math.sqrt(head_dim)
    head_of = jnp.arange(E) // head_dim
    onehot = (head_of[:, None] == jnp.arange(num_heads)[None, :]).astype(f32)  # (E, H)
    qmat = (q * scale)[:, None] * onehot                             # (E, H)
    kq = (wk.T @ qmat).astype(mm)                                    # logits = h @ kq
    expand = onehot.T                                                # (H, E), f32

    def t(w):
        return jnp.asarray(w, f32).T.astype(mm)

    return {
        "num_heads": num_heads,
        "kq": kq,
        "expand": expand,
        "w1": t(raw["w1"]), "b1": jnp.asarray(raw["b1"], f32).reshape(1, E),
        "w2": t(raw["w2"]), "b2": jnp.asarray(raw["b2"], f32).reshape(1, E),
        "wv": wv.T.astype(mm), "bv": bv.reshape(1, E),
        "wo": t(raw["out_proj_weight"]),
        "bo": jnp.asarray(raw["out_proj_bias"], f32).reshape(1, E),
        "gamma": jnp.asarray(raw["ln_gamma"], f32).reshape(1, E),
        "beta": jnp.asarray(raw["ln_beta"], f32).reshape(1, E),
    }


# ---------------------------------------------------------------------------
# Generation-aware sizing
# ---------------------------------------------------------------------------
_VMEM_CAP_BYTES = {"v5": 100 << 20, "v6": 100 << 20, "v7": 48 << 20}
_TARGET_ROWS = {"v5": 512, "v6": 512, "v7": 256}


def _tpu_generation():
    try:
        kind = jax.devices()[0].device_kind.lower()
    except Exception:
        return None
    if "v7" in kind or "tpu7" in kind:
        return "v7"
    if "v6" in kind:
        return "v6"
    if "v5" in kind:
        return "v5"
    return None


def _pick_batch_block(batch, seq, *, target_rows=256, prefer_split=False):
    """Batch elements folded into one grid step.  Must be the whole batch or a
    multiple of 8 so the (Bblk, E)/(Bblk, S) output blocks are legal tiles."""
    cands = [d for d in range(8, batch, 8) if batch % d == 0]
    pick = batch
    for d in sorted(cands):
        if d * seq >= target_rows:
            pick = d
            break
    if prefer_split and pick == batch and cands:
        # v7x: make sure the single "parallel" grid axis has >= 2 blocks so both
        # TensorCores get work.
        pick = max(cands)
    return pick


@functools.lru_cache(maxsize=None)
def _buffered1_supported():
    """Probe (once) whether single-buffered constants via pipeline_mode=
    pl.Buffered(1) lower & compile on this backend."""
    def _probe_kernel(a_ref, c_ref, o_ref):
        o_ref[...] = a_ref[...] + c_ref[...]

    try:
        fn = pl.pallas_call(
            _probe_kernel,
            out_shape=jax.ShapeDtypeStruct((16, 128), jnp.float32),
            grid=(2,),
            in_specs=[
                pl.BlockSpec((8, 128), lambda i: (i, 0)),
                pl.BlockSpec((8, 128), lambda i: (0, 0),
                             pipeline_mode=pl.Buffered(1)),
            ],
            out_specs=pl.BlockSpec((8, 128), lambda i: (i, 0)),
        )
        a = jax.ShapeDtypeStruct((16, 128), jnp.float32)
        c = jax.ShapeDtypeStruct((8, 128), jnp.float32)
        jax.jit(fn).lower(a, c).compile()
        return True
    except Exception:
        return False


# ---------------------------------------------------------------------------
# jit-compiled forward
# ---------------------------------------------------------------------------
class _Config(NamedTuple):
    batch_block: int
    num_heads: int
    score_head_i: int
    vmem_limit_bytes: Optional[int]
    single_buffer_weights: bool
    lane_dense_score: bool


@functools.partial(jax.jit, static_argnums=(0,))
def _prompt_aggr_jit(cfg, batch_x, batch_mask, kq, expand,
                     w1, b1, w2, b2, wv, bv, wo, bo, gamma, beta):
    B, S, E = batch_x.shape
    H = cfg.num_heads
    Bblk = cfg.batch_block
    G = B // Bblk
    f32 = jnp.float32
    cdt = w1.dtype

    # Stream activations in the matmul dtype (bf16 by default; halves the only
    # per-step HBM stream) and the mask as a narrow bf16 block.
    x = batch_x.astype(cdt)
    mask = batch_mask.astype(jnp.bfloat16).reshape(B, S, 1)

    def const_spec(shape):
        nd = len(shape)

        def idx(g):
            return (0,) * nd

        if cfg.single_buffer_weights:
            return pl.BlockSpec(shape, idx, pipeline_mode=pl.Buffered(1))
        return pl.BlockSpec(shape, idx)

    in_specs = [
        pl.BlockSpec((Bblk, S, E), lambda g: (g, 0, 0)),      # x      (streamed)
        pl.BlockSpec((Bblk, S, 1), lambda g: (g, 0, 0)),      # mask   (streamed)
        const_spec((E, H)),                                    # kq
        const_spec((H, E)),                                    # expand
        const_spec((E, E)), const_spec((1, E)),                # w1, b1
        const_spec((E, E)), const_spec((1, E)),                # w2, b2
        const_spec((E, E)), const_spec((1, E)),                # wv, bv
        const_spec((E, E)), const_spec((1, E)),                # wo, bo
        const_spec((1, E)), const_spec((1, E)),                # gamma, beta
    ]

    if cfg.lane_dense_score:
        score_shape = (B, S)
        score_spec = pl.BlockSpec((Bblk, S), lambda g: (g, 0))
    else:
        score_shape = (B, S, 1)
        score_spec = pl.BlockSpec((Bblk, S, 1), lambda g: (g, 0, 0))

    kernel = functools.partial(prompt_aggr_kernel,
                               score_head_i=cfg.score_head_i,
                               lane_dense_score=cfg.lane_dense_score)

    global_out, score = pl.pallas_call(
        kernel,
        out_shape=(jax.ShapeDtypeStruct((B, E), f32),
                   jax.ShapeDtypeStruct(score_shape, f32)),
        grid=(G,),
        in_specs=in_specs,
        out_specs=[pl.BlockSpec((Bblk, E), lambda g: (g, 0)), score_spec],
        compiler_params=pltpu.CompilerParams(
            dimension_semantics=("parallel",),
            vmem_limit_bytes=cfg.vmem_limit_bytes),
    )(x, mask, kq, expand, w1, b1, w2, b2, wv, bv, wo, bo, gamma, beta)

    # (B, S, 1) / (B, S) and (B, 1, S) share the same row-major order.
    return global_out, score.reshape(B, 1, S)


def prompt_aggr_forward(batch_x, batch_mask, params, *, score_head_i=0,
                        batch_block=None, lane_dense_score=None):
    """Pallas implementation of PromptAggr.forward (local_loss=False).

    batch_x:    (B, S, E) float
    batch_mask: (B, S) bool, True = valid token
    returns (global_out (B, E), local_out=None, score (B, 1, S))
    """
    B, S, E = batch_x.shape
    H = int(params["num_heads"])
    if score_head_i < 0:
        # TODO(synk): score_head_i == -1 (return all heads' weights) not implemented.
        raise NotImplementedError("score_head_i == -1 is not supported")
    assert score_head_i < H

    gen = _tpu_generation()
    if batch_block is None:
        Bblk = _pick_batch_block(B, S,
                                 target_rows=_TARGET_ROWS.get(gen, 256),
                                 prefer_split=(gen == "v7"))
    else:
        Bblk = batch_block
    assert B % Bblk == 0 and (Bblk == B or Bblk % 8 == 0), (B, Bblk)

    if lane_dense_score is None:
        lane_dense_score = S >= 128   # narrow S: keep the simple lane-slice store

    cfg = _Config(batch_block=Bblk,
                  num_heads=H,
                  score_head_i=int(score_head_i),
                  vmem_limit_bytes=_VMEM_CAP_BYTES.get(gen),
                  single_buffer_weights=_buffered1_supported(),
                  lane_dense_score=bool(lane_dense_score))

    global_out, score = _prompt_aggr_jit(
        cfg, batch_x, batch_mask,
        params["kq"], params["expand"],
        params["w1"], params["b1"], params["w2"], params["b2"],
        params["wv"], params["bv"], params["wo"], params["bo"],
        params["gamma"], params["beta"])

    local_out = None   # local_loss=False in this instantiation
    return global_out, local_out, score


# ---------------------------------------------------------------------------
# Test helpers
# ---------------------------------------------------------------------------
def init_params(key, emb_dim):
    ks = jax.random.split(key, 8)
    std = 0.02
    E = emb_dim
    return {
        "prompt_query": jax.random.normal(ks[0], (E,), jnp.float32),
        "w1": std * jax.random.normal(ks[1], (E, E), jnp.float32),
        "b1": jnp.zeros((E,), jnp.float32),
        "w2": std * jax.random.normal(ks[2], (E, E), jnp.float32),
        "b2": jnp.zeros((E,), jnp.float32),
        "in_proj_weight": std * jax.random.normal(ks[3], (3 * E, E), jnp.float32),
        "in_proj_bias": std * jax.random.normal(ks[4], (3 * E,), jnp.float32),
        "out_proj_weight": std * jax.random.normal(ks[5], (E, E), jnp.float32),
        "out_proj_bias": jnp.zeros((E,), jnp.float32),
        "ln_gamma": jnp.ones((E,), jnp.float32),
        "ln_beta": jnp.zeros((E,), jnp.float32),
    }


def _reference_forward(batch_x, batch_mask, raw, num_heads, score_head_i=0):
    """Pure-JAX f32 mirror of the PyTorch module (tolerance check only)."""
    B, S, E = batch_x.shape
    Dh = E // num_heads
    h = jnp.maximum(batch_x @ raw["w1"].T + raw["b1"], 0.0) @ raw["w2"].T + raw["b2"]
    in_w, in_b = raw["in_proj_weight"], raw["in_proj_bias"]
    q = raw["prompt_query"] @ in_w[:E].T + in_b[:E]
    k = h @ in_w[E:2 * E].T + in_b[E:2 * E]
    v = h @ in_w[2 * E:].T + in_b[2 * E:]
    qh = q.reshape(num_heads, Dh)
    kh = k.reshape(B, S, num_heads, Dh)
    vh = v.reshape(B, S, num_heads, Dh)
    s = jnp.einsum("hd,bshd->bhs", qh, kh) / math.sqrt(Dh)
    s = jnp.where(batch_mask[:, None, :], s, -jnp.inf)
    p = jax.nn.softmax(s, axis=-1)
    attn = jnp.einsum("bhs,bshd->bhd", p, vh).reshape(B, E)
    o = attn @ raw["out_proj_weight"].T + raw["out_proj_bias"]
    mu = o.mean(-1, keepdims=True)
    var = ((o - mu) ** 2).mean(-1, keepdims=True)
    o = (o - mu) * jax.lax.rsqrt(var + 1e-5) * raw["ln_gamma"] + raw["ln_beta"]
    return o, p[:, score_head_i][:, None, :]


if __name__ == "__main__":
    B, S, E, H = 2, 8, 32, 4
    key = jax.random.PRNGKey(0)
    kx, kp = jax.random.split(key)

    batch_x = jax.random.normal(kx, (B, S, E), jnp.float32)
    # True = valid token; mask out the last 3 tokens of batch element 1.
    batch_mask = jnp.ones((B, S), dtype=bool).at[1, S - 3:].set(False)

    raw = init_params(kp, E)
    params = prepare_params(raw, num_heads=H)   # bf16 matmul operands by default

    global_out, local_out, score = prompt_aggr_forward(
        batch_x, batch_mask, params, score_head_i=0)
    jax.block_until_ready((global_out, score))

    assert global_out.shape == (B, E)
    assert score.shape == (B, 1, S)
    assert local_out is None

    ref_out, ref_score = _reference_forward(batch_x, batch_mask, raw, H, 0)
    assert jnp.allclose(global_out, ref_out, atol=5e-2, rtol=5e-2)
    assert jnp.allclose(score, ref_score, atol=2e-2, rtol=2e-2)

    print("KERNEL_OK")
</pallas_src>

<mosaic_0001>
module attributes {stable_mosaic.version = 11 : i64} {
  func.func @prompt_aggr_kernel(%arg0: i32, %arg1: memref<2x8x32xbf16, #tpu.memory_space<vmem>>, %arg2: memref<2x8x1xbf16, #tpu.memory_space<vmem>>, %arg3: memref<32x4xbf16, #tpu.memory_space<vmem>>, %arg4: memref<4x32xf32, #tpu.memory_space<vmem>>, %arg5: memref<32x32xbf16, #tpu.memory_space<vmem>>, %arg6: memref<1x32xf32, #tpu.memory_space<vmem>>, %arg7: memref<32x32xbf16, #tpu.memory_space<vmem>>, %arg8: memref<1x32xf32, #tpu.memory_space<vmem>>, %arg9: memref<32x32xbf16, #tpu.memory_space<vmem>>, %arg10: memref<1x32xf32, #tpu.memory_space<vmem>>, %arg11: memref<32x32xbf16, #tpu.memory_space<vmem>>, %arg12: memref<1x32xf32, #tpu.memory_space<vmem>>, %arg13: memref<1x32xf32, #tpu.memory_space<vmem>>, %arg14: memref<1x32xf32, #tpu.memory_space<vmem>>, %arg15: memref<2x32xf32, #tpu.memory_space<vmem>>, %arg16: memref<2x8x1xf32, #tpu.memory_space<vmem>>) attributes {dimension_semantics = [#tpu.dimension_semantics<parallel>], iteration_bounds = array<i64: 1>, scalar_prefetch = 0 : i64, scratch_operands = 0 : i64, tpu.core_type = #tpu.core_type<tc>, window_params = [{transform_indices = @transform_0, window_bounds = array<i64: 2, 8, 32>}, {transform_indices = @transform_1, window_bounds = array<i64: 2, 8, 1>}, {pipeline_mode = #tpu.pipeline_mode<synchronous>, transform_indices = @transform_2, window_bounds = array<i64: 32, 4>}, {pipeline_mode = #tpu.pipeline_mode<synchronous>, transform_indices = @transform_3, window_bounds = array<i64: 4, 32>}, {pipeline_mode = #tpu.pipeline_mode<synchronous>, transform_indices = @transform_4, window_bounds = array<i64: 32, 32>}, {pipeline_mode = #tpu.pipeline_mode<synchronous>, transform_indices = @transform_5, window_bounds = array<i64: 1, 32>}, {pipeline_mode = #tpu.pipeline_mode<synchronous>, transform_indices = @transform_6, window_bounds = array<i64: 32, 32>}, {pipeline_mode = #tpu.pipeline_mode<synchronous>, transform_indices = @transform_7, window_bounds = array<i64: 1, 32>}, {pipeline_mode = #tpu.pipeline_mode<synchronous>, transform_indices = @transform_8, window_bounds = array<i64: 32, 32>}, {pipeline_mode = #tpu.pipeline_mode<synchronous>, transform_indices = @transform_9, window_bounds = array<i64: 1, 32>}, {pipeline_mode = #tpu.pipeline_mode<synchronous>, transform_indices = @transform_10, window_bounds = array<i64: 32, 32>}, {pipeline_mode = #tpu.pipeline_mode<synchronous>, transform_indices = @transform_11, window_bounds = array<i64: 1, 32>}, {pipeline_mode = #tpu.pipeline_mode<synchronous>, transform_indices = @transform_12, window_bounds = array<i64: 1, 32>}, {pipeline_mode = #tpu.pipeline_mode<synchronous>, transform_indices = @transform_13, window_bounds = array<i64: 1, 32>}, {transform_indices = @transform_14, window_bounds = array<i64: 2, 32>}, {transform_indices = @transform_15, window_bounds = array<i64: 2, 8, 1>}]} {
    %c0 = arith.constant 0 : index
    %c0_0 = arith.constant 0 : index
    %c0_1 = arith.constant 0 : index
    %0 = vector.load %arg1[%c0, %c0_0, %c0_1] : memref<2x8x32xbf16, #tpu.memory_space<vmem>>, vector<2x8x32xbf16>
    %1 = vector.shape_cast %0 : vector<2x8x32xbf16> to vector<16x32xbf16>
    %c0_2 = arith.constant 0 : index
    %c0_3 = arith.constant 0 : index
    %2 = vector.load %arg5[%c0_2, %c0_3] : memref<32x32xbf16, #tpu.memory_space<vmem>>, vector<32x32xbf16>
    %cst = arith.constant dense<0.000000e+00> : vector<16x32xf32>
    %3 = tpu.matmul %1, %2, %cst {dimension_numbers = #tpu.dot_dimension_numbers<[1], [0], [0], [1], [0, 0, 1, 1], [], []>} : vector<16x32xbf16>, vector<32x32xbf16>, vector<16x32xf32> -> vector<16x32xf32>
    %c0_4 = arith.constant 0 : index
    %c0_5 = arith.constant 0 : index
    %4 = vector.load %arg6[%c0_4, %c0_5] : memref<1x32xf32, #tpu.memory_space<vmem>>, vector<1x32xf32>
    %5 = vector.broadcast %4 : vector<1x32xf32> to vector<16x32xf32>
    %6 = arith.addf %3, %5 : vector<16x32xf32>
    %cst_6 = arith.constant 0.000000e+00 : f32
    %7 = vector.broadcast %cst_6 : f32 to vector<16x32xf32>
    %8 = arith.maximumf %6, %7 : vector<16x32xf32>
    %9 = arith.truncf %8 : vector<16x32xf32> to vector<16x32xbf16>
    %c0_7 = arith.constant 0 : index
    %c0_8 = arith.constant 0 : index
    %10 = vector.load %arg7[%c0_7, %c0_8] : memref<32x32xbf16, #tpu.memory_space<vmem>>, vector<32x32xbf16>
    %cst_9 = arith.constant dense<0.000000e+00> : vector<16x32xf32>
    %11 = tpu.matmul %9, %10, %cst_9 {dimension_numbers = #tpu.dot_dimension_numbers<[1], [0], [0], [1], [0, 0, 1, 1], [], []>} : vector<16x32xbf16>, vector<32x32xbf16>, vector<16x32xf32> -> vector<16x32xf32>
    %c0_10 = arith.constant 0 : index
    %c0_11 = arith.constant 0 : index
    %12 = vector.load %arg8[%c0_10, %c0_11] : memref<1x32xf32, #tpu.memory_space<vmem>>, vector<1x32xf32>
    %13 = vector.broadcast %12 : vector<1x32xf32> to vector<16x32xf32>
    %14 = arith.addf %11, %13 : vector<16x32xf32>
    %15 = arith.truncf %14 : vector<16x32xf32> to vector<16x32xbf16>
    %c0_12 = arith.constant 0 : index
    %c0_13 = arith.constant 0 : index
    %16 = vector.load %arg9[%c0_12, %c0_13] : memref<32x32xbf16, #tpu.memory_space<vmem>>, vector<32x32xbf16>
    %cst_14 = arith.constant dense<0.000000e+00> : vector<16x32xf32>
    %17 = tpu.matmul %15, %16, %cst_14 {dimension_numbers = #tpu.dot_dimension_numbers<[1], [0], [0], [1], [0, 0, 1, 1], [], []>} : vector<16x32xbf16>, vector<32x32xbf16>, vector<16x32xf32> -> vector<16x32xf32>
    %c0_15 = arith.constant 0 : index
    %c0_16 = arith.constant 0 : index
    %18 = vector.load %arg10[%c0_15, %c0_16] : memref<1x32xf32, #tpu.memory_space<vmem>>, vector<1x32xf32>
    %19 = vector.broadcast %18 : vector<1x32xf32> to vector<16x32xf32>
    %20 = arith.addf %17, %19 : vector<16x32xf32>
    %c0_17 = arith.constant 0 : index
    %c0_18 = arith.constant 0 : index
    %21 = vector.load %arg3[%c0_17, %c0_18] : memref<32x4xbf16, #tpu.memory_space<vmem>>, vector<32x4xbf16>
    %cst_19 = arith.constant dense<0.000000e+00> : vector<16x4xf32>
    %22 = tpu.matmul %15, %21, %cst_19 {dimension_numbers = #tpu.dot_dimension_numbers<[1], [0], [0], [1], [0, 0, 1, 1], [], []>} : vector<16x32xbf16>, vector<32x4xbf16>, vector<16x4xf32> -> vector<16x4xf32>
    %23 = vector.shape_cast %22 : vector<16x4xf32> to vector<2x8x4xf32>
    %c0_20 = arith.constant 0 : index
    %c0_21 = arith.constant 0 : index
    %c0_22 = arith.constant 0 : index
    %24 = vector.load %arg2[%c0_20, %c0_21, %c0_22] : memref<2x8x1xbf16, #tpu.memory_space<vmem>>, vector<2x8x1xbf16>
    %cst_23 = arith.constant 0.000000e+00 : bf16
    %25 = vector.broadcast %cst_23 : bf16 to vector<2x8x1xbf16>
    %26 = arith.cmpf ogt, %24, %25 : vector<2x8x1xbf16>
    %cst_24 = arith.constant 0xFF800000 : f32
    %27 = vector.shape_cast %26 : vector<2x8x1xi1> to vector<2x8x1xi1>
    %28 = vector.broadcast %27 : vector<2x8x1xi1> to vector<2x8x4xi1>
    %29 = vector.broadcast %cst_24 : f32 to vector<2x8x4xf32>
    %30 = arith.select %28, %23, %29 : vector<2x8x4xi1>, vector<2x8x4xf32>
    %cst_25 = arith.constant dense<0xFF800000> : vector<2x4xf32>
    %31 = vector.multi_reduction <maximumf>, %30, %cst_25 [1] : vector<2x8x4xf32> to vector<2x4xf32>
    %32 = vector.shape_cast %31 : vector<2x4xf32> to vector<2x1x4xf32>
    %33 = vector.broadcast %32 : vector<2x1x4xf32> to vector<2x8x4xf32>
    %34 = arith.subf %30, %33 : vector<2x8x4xf32>
    %35 = math.exp %34 : vector<2x8x4xf32>
    %cst_26 = arith.constant dense<0.000000e+00> : vector<2x4xf32>
    %36 = vector.multi_reduction <add>, %35, %cst_26 [1] : vector<2x8x4xf32> to vector<2x4xf32>
    %37 = vector.shape_cast %36 : vector<2x4xf32> to vector<2x1x4xf32>
    %38 = tpu.reciprocal %37 {approx = true} : vector<2x1x4xf32> -> vector<2x1x4xf32>
    %39 = vector.broadcast %38 : vector<2x1x4xf32> to vector<2x8x4xf32>
    %40 = arith.mulf %35, %39 : vector<2x8x4xf32>
    %41 = vector.extract_strided_slice %40 {offsets = [0, 0, 0], sizes = [2, 8, 1], strides = [1, 1, 1]} : vector<2x8x4xf32> to vector<2x8x1xf32>
    %c0_27 = arith.constant 0 : index
    %c0_28 = arith.constant 0 : index
    %c0_29 = arith.constant 0 : index
    %42 = vector.load %arg16[%c0_27, %c0_28, %c0_29] : memref<2x8x1xf32, #tpu.memory_space<vmem>>, vector<2x8x1xf32>
    tpu.vector_store %arg16[%c0_27, %c0_28, %c0_29], %41 {strides = array<i32>} : memref<2x8x1xf32, #tpu.memory_space<vmem>>, vector<2x8x1xf32>,
    %43 = vector.shape_cast %40 : vector<2x8x4xf32> to vector<16x4xf32>
    %c0_30 = arith.constant 0 : index
    %c0_31 = arith.constant 0 : index
    %44 = vector.load %arg4[%c0_30, %c0_31] : memref<4x32xf32, #tpu.memory_space<vmem>>, vector<4x32xf32>
    %cst_32 = arith.constant dense<0.000000e+00> : vector<16x32xf32>
    %45 = tpu.matmul %43, %44, %cst_32 {dimension_numbers = #tpu.dot_dimension_numbers<[1], [0], [0], [1], [0, 0, 1, 1], [], []>} : vector<16x4xf32>, vector<4x32xf32>, vector<16x32xf32> -> vector<16x32xf32>
    %46 = arith.mulf %45, %20 : vector<16x32xf32>
    %47 = vector.shape_cast %46 : vector<16x32xf32> to vector<2x8x32xf32>
    %cst_33 = arith.constant dense<0.000000e+00> : vector<2x32xf32>
    %48 = vector.multi_reduction <add>, %47, %cst_33 [1] : vector<2x8x32xf32> to vector<2x32xf32>
    %49 = arith.truncf %48 : vector<2x32xf32> to vector<2x32xbf16>
    %c0_34 = arith.constant 0 : index
    %c0_35 = arith.constant 0 : index
    %50 = vector.load %arg11[%c0_34, %c0_35] : memref<32x32xbf16, #tpu.memory_space<vmem>>, vector<32x32xbf16>
    %cst_36 = arith.constant dense<0.000000e+00> : vector<2x32xf32>
    %51 = tpu.matmul %49, %50, %cst_36 {dimension_numbers = #tpu.dot_dimension_numbers<[1], [0], [0], [1], [0, 0, 1, 1], [], []>} : vector<2x32xbf16>, vector<32x32xbf16>, vector<2x32xf32> -> vector<2x32xf32>
    %c0_37 = arith.constant 0 : index
    %c0_38 = arith.constant 0 : index
    %52 = vector.load %arg12[%c0_37, %c0_38] : memref<1x32xf32, #tpu.memory_space<vmem>>, vector<1x32xf32>
    %53 = vector.broadcast %52 : vector<1x32xf32> to vector<2x32xf32>
    %54 = arith.addf %51, %53 : vector<2x32xf32>
    %cst_39 = arith.constant dense<0.000000e+00> : vector<2xf32>
    %55 = vector.multi_reduction <add>, %54, %cst_39 [1] : vector<2x32xf32> to vector<2xf32>
    %56 = vector.shape_cast %55 : vector<2xf32> to vector<2x1xf32>
    %cst_40 = arith.constant 3.200000e+01 : f32
    %57 = vector.broadcast %cst_40 : f32 to vector<2x1xf32>
    %58 = arith.divf %56, %57 : vector<2x1xf32>
    %59 = vector.broadcast %58 : vector<2x1xf32> to vector<2x32xf32>
    %60 = arith.subf %54, %59 : vector<2x32xf32>
    %61 = arith.mulf %60, %60 : vector<2x32xf32>
    %cst_41 = arith.constant dense<0.000000e+00> : vector<2xf32>
    %62 = vector.multi_reduction <add>, %61, %cst_41 [1] : vector<2x32xf32> to vector<2xf32>
    %63 = vector.shape_cast %62 : vector<2xf32> to vector<2x1xf32>
    %cst_42 = arith.constant 3.200000e+01 : f32
    %64 = vector.broadcast %cst_42 : f32 to vector<2x1xf32>
    %65 = arith.divf %63, %64 : vector<2x1xf32>
    %66 = vector.broadcast %58 : vector<2x1xf32> to vector<2x32xf32>
    %67 = arith.subf %54, %66 : vector<2x32xf32>
    %cst_43 = arith.constant 9.99999974E-6 : f32
    %68 = vector.broadcast %cst_43 : f32 to vector<2x1xf32>
    %69 = arith.addf %65, %68 : vector<2x1xf32>
    %70 = math.rsqrt %69 : vector<2x1xf32>
    %71 = vector.broadcast %70 : vector<2x1xf32> to vector<2x32xf32>
    %72 = arith.mulf %67, %71 : vector<2x32xf32>
    %c0_44 = arith.constant 0 : index
    %c0_45 = arith.constant 0 : index
    %73 = vector.load %arg13[%c0_44, %c0_45] : memref<1x32xf32, #tpu.memory_space<vmem>>, vector<1x32xf32>
    %74 = vector.broadcast %73 : vector<1x32xf32> to vector<2x32xf32>
    %75 = arith.mulf %72, %74 : vector<2x32xf32>
    %c0_46 = arith.constant 0 : index
    %c0_47 = arith.constant 0 : index
    %76 = vector.load %arg14[%c0_46, %c0_47] : memref<1x32xf32, #tpu.memory_space<vmem>>, vector<1x32xf32>
    %77 = vector.broadcast %76 : vector<1x32xf32> to vector<2x32xf32>
    %78 = arith.addf %75, %77 : vector<2x32xf32>
    %c0_48 = arith.constant 0 : index
    %c0_49 = arith.constant 0 : index
    %79 = vector.load %arg15[%c0_48, %c0_49] : memref<2x32xf32, #tpu.memory_space<vmem>>, vector<2x32xf32>
    tpu.vector_store %arg15[%c0_48, %c0_49], %78 {strides = array<i32>} : memref<2x32xf32, #tpu.memory_space<vmem>>, vector<2x32xf32>,
    return
  }
  func.func @transform_0(%arg0: i32) -> (i32, i32, i32) {
    %c0_i32 = arith.constant 0 : i32
    %c0_i32_0 = arith.constant 0 : i32
    %c0_i32_1 = arith.constant 0 : i32
    return %arg0, %c0_i32, %c0_i32_0 : i32, i32, i32
  }
  func.func @transform_1(%arg0: i32) -> (i32, i32, i32) {
    %c0_i32 = arith.constant 0 : i32
    %c0_i32_0 = arith.constant 0 : i32
    %c0_i32_1 = arith.constant 0 : i32
    return %arg0, %c0_i32, %c0_i32_0 : i32, i32, i32
  }
  func.func @transform_2(%arg0: i32) -> (i32, i32) {
    %c0_i32 = arith.constant 0 : i32
    %c0_i32_0 = arith.constant 0 : i32
    %c0_i32_1 = arith.constant 0 : i32
    return %c0_i32, %c0_i32_0 : i32, i32
  }
  func.func @transform_3(%arg0: i32) -> (i32, i32) {
    %c0_i32 = arith.constant 0 : i32
    %c0_i32_0 = arith.constant 0 : i32
    %c0_i32_1 = arith.constant 0 : i32
    return %c0_i32, %c0_i32_0 : i32, i32
  }
  func.func @transform_4(%arg0: i32) -> (i32, i32) {
    %c0_i32 = arith.constant 0 : i32
    %c0_i32_0 = arith.constant 0 : i32
    %c0_i32_1 = arith.constant 0 : i32
    return %c0_i32, %c0_i32_0 : i32, i32
  }
  func.func @transform_5(%arg0: i32) -> (i32, i32) {
    %c0_i32 = arith.constant 0 : i32
    %c0_i32_0 = arith.constant 0 : i32
    %c0_i32_1 = arith.constant 0 : i32
    return %c0_i32, %c0_i32_0 : i32, i32
  }
  func.func @transform_6(%arg0: i32) -> (i32, i32) {
    %c0_i32 = arith.constant 0 : i32
    %c0_i32_0 = arith.constant 0 : i32
    %c0_i32_1 = arith.constant 0 : i32
    return %c0_i32, %c0_i32_0 : i32, i32
  }
  func.func @transform_7(%arg0: i32) -> (i32, i32) {
    %c0_i32 = arith.constant 0 : i32
    %c0_i32_0 = arith.constant 0 : i32
    %c0_i32_1 = arith.constant 0 : i32
    return %c0_i32, %c0_i32_0 : i32, i32
  }
  func.func @transform_8(%arg0: i32) -> (i32, i32) {
    %c0_i32 = arith.constant 0 : i32
    %c0_i32_0 = arith.constant 0 : i32
    %c0_i32_1 = arith.constant 0 : i32
    return %c0_i32, %c0_i32_0 : i32, i32
  }
  func.func @transform_9(%arg0: i32) -> (i32, i32) {
    %c0_i32 = arith.constant 0 : i32
    %c0_i32_0 = arith.constant 0 : i32
    %c0_i32_1 = arith.constant 0 : i32
    return %c0_i32, %c0_i32_0 : i32, i32
  }
  func.func @transform_10(%arg0: i32) -> (i32, i32) {
    %c0_i32 = arith.constant 0 : i32
    %c0_i32_0 = arith.constant 0 : i32
    %c0_i32_1 = arith.constant 0 : i32
    return %c0_i32, %c0_i32_0 : i32, i32
  }
  func.func @transform_11(%arg0: i32) -> (i32, i32) {
    %c0_i32 = arith.constant 0 : i32
    %c0_i32_0 = arith.constant 0 : i32
    %c0_i32_1 = arith.constant 0 : i32
    return %c0_i32, %c0_i32_0 : i32, i32
  }
  func.func @transform_12(%arg0: i32) -> (i32, i32) {
    %c0_i32 = arith.constant 0 : i32
    %c0_i32_0 = arith.constant 0 : i32
    %c0_i32_1 = arith.constant 0 : i32
    return %c0_i32, %c0_i32_0 : i32, i32
  }
  func.func @transform_13(%arg0: i32) -> (i32, i32) {
    %c0_i32 = arith.constant 0 : i32
    %c0_i32_0 = arith.constant 0 : i32
    %c0_i32_1 = arith.constant 0 : i32
    return %c0_i32, %c0_i32_0 : i32, i32
  }
  func.func @transform_14(%arg0: i32) -> (i32, i32) {
    %c0_i32 = arith.constant 0 : i32
    %c0_i32_0 = arith.constant 0 : i32
    return %arg0, %c0_i32 : i32, i32
  }
  func.func @transform_15(%arg0: i32) -> (i32, i32, i32) {
    %c0_i32 = arith.constant 0 : i32
    %c0_i32_0 = arith.constant 0 : i32
    %c0_i32_1 = arith.constant 0 : i32
    return %arg0, %c0_i32, %c0_i32_0 : i32, i32, i32
  }
}

</mosaic_0001>

<llo_original>
// kernel: _prompt_aggr_jit.1
$region0: #{_prompt_aggr_jit.1}
  #allocation0 [shape = 'u32[]', space=smem, size = 0x4, offset = 0x4, fixed_abs, tag = 'smem constant byte address 0x4 - core index']
  #allocation1 [shape = 'u32[144,128]{1,0:T(1,128)}', space=vmem, size = 0x12000, scoped, tag = 'internal scratch']
  %s0 = inlined_call_operand.vmem [shape: bf16[2,8,32], index: 0, kind: input, shape index: {}]
  %s1 = inlined_call_operand.vmem [shape: bf16[2,8,1], index: 1, kind: input, shape index: {}]
  %s2 = inlined_call_operand.vmem [shape: bf16[32,4], index: 2, kind: input, shape index: {}]
  %s3 = inlined_call_operand.hbm [shape: f32[4,32], index: 3, kind: input, shape index: {}]
  %s4 = inlined_call_operand.vmem [shape: bf16[32,32], index: 4, kind: input, shape index: {}]
  %s5 = inlined_call_operand.vmem [shape: f32[1,32], index: 5, kind: input, shape index: {}]
  %s6 = inlined_call_operand.vmem [shape: bf16[32,32], index: 6, kind: input, shape index: {}]
  %s7 = inlined_call_operand.vmem [shape: f32[1,32], index: 7, kind: input, shape index: {}]
  %s8 = inlined_call_operand.vmem [shape: bf16[32,32], index: 8, kind: input, shape index: {}]
  %s9 = inlined_call_operand.vmem [shape: f32[1,32], index: 9, kind: input, shape index: {}]
  %s10 = inlined_call_operand.vmem [shape: bf16[32,32], index: 10, kind: input, shape index: {}]
  %s11 = inlined_call_operand.vmem [shape: f32[1,32], index: 11, kind: input, shape index: {}]
  %s12 = inlined_call_operand.vmem [shape: f32[1,32], index: 12, kind: input, shape index: {}]
  %s13 = inlined_call_operand.vmem [shape: f32[1,32], index: 13, kind: input, shape index: {}]
  %s14 = inlined_call_operand.hbm [shape: f32[2,32], index: 14, kind: output, shape index: {0}]
  %s15 = inlined_call_operand.vmem [shape: f32[2,8,1], index: 15, kind: output, shape index: {1}]
  %16 = xla_tuple %s14, %s15
  %s17 = sld [smem:[#allocation0]]
  $region78: #{_prompt_aggr_jit.1} parent=0
    _
  %s19 = ssub.s32 1, %s17
  %s20 = scalar_select 0, %s19, %s17
  $region1: #{_prompt_aggr_jit.1} parent=0
    #allocation2 [shape = 'u8[2048]{0}', space=vmem, size = 0x800, scoped, tag = 'input window, operand 3, single buffered']
    #allocation3 [shape = 's32[1]{0}', space=sflag, size = 0x4, scoped, tag = 'scoped memory for _prompt_aggr_jit.1']
    #allocation4 [shape = 's32[1]{0}', space=sflag, size = 0x4, scoped, tag = 'scoped memory for _prompt_aggr_jit.1']
    #allocation5 [shape = 'u8[1024]{0}', space=vmem, size = 0x400, scoped, tag = 'output window, operand 0, single buffered']
    %21 = vsyncpa [#allocation3], 0
    %22 = vsyncpa [#allocation4], 0
    // Predicated region
    $region2: #{_prompt_aggr_jit.1} parent=1 // pred_check
      _
    $region3: #{_prompt_aggr_jit.1} parent=1 // pred_check_branch
      %24 = sbr.rel (0) target = $region5
    $region4: #{_prompt_aggr_jit.1} parent=1 // pred_region
      _
    $region5: #{_prompt_aggr_jit.1} parent=1 // pred_fallthru
      _
    // Predicated region
    $region6: #{_prompt_aggr_jit.1} parent=1 // pred_check
      _
    $region7: #{_prompt_aggr_jit.1} parent=1 // pred_check_branch
      %26 = sbr.rel (0) target = $region9
    $region8: #{_prompt_aggr_jit.1} parent=1 // pred_region
      _
    $region9: #{_prompt_aggr_jit.1} parent=1 // pred_fallthru
      _
    // Predicated region
    $region10: #{_prompt_aggr_jit.1} parent=1 // pred_check
      _
    $region11: #{_prompt_aggr_jit.1} parent=1 // pred_check_branch
      %28 = sbr.rel (0) target = $region13
    $region12: #{_prompt_aggr_jit.1} parent=1 // pred_region
      _
    $region13: #{_prompt_aggr_jit.1} parent=1 // pred_fallthru
      _
    // Predicated region
    $region14: #{_prompt_aggr_jit.1} parent=1 // pred_check
      _
    $region15: #{_prompt_aggr_jit.1} parent=1 // pred_check_branch
      %30 = sbr.rel (0) target = $region17
    $region16: #{_prompt_aggr_jit.1} parent=1 // pred_region
      %s32 = ssub.s32 64, 64
      %33 = vsyncadd [#allocation3], %s32
      %s35 = sshll.u32 [#allocation2], 4
      %s36 = int_to_ptr.vmem [resolvable:$true] %s35
      %38 = dma.hbm_to_vmem [thread:$0]  %s3, 64, %s36, [#allocation3]
    $region17: #{_prompt_aggr_jit.1} parent=1 // pred_fallthru
      _
    // Predicated region
    $region18: #{_prompt_aggr_jit.1} parent=1 // pred_check
      _
    $region19: #{_prompt_aggr_jit.1} parent=1 // pred_check_branch
      %40 = sbr.rel (0) target = $region21
    $region20: #{_prompt_aggr_jit.1} parent=1 // pred_region
      _
    $region21: #{_prompt_aggr_jit.1} parent=1 // pred_fallthru
      _
    // Predicated region
    $region22: #{_prompt_aggr_jit.1} parent=1 // pred_check
      _
    $region23: #{_prompt_aggr_jit.1} parent=1 // pred_check_branch
      %42 = sbr.rel (0) target = $region25
    $region24: #{_prompt_aggr_jit.1} parent=1 // pred_region
      _
    $region25: #{_prompt_aggr_jit.1} parent=1 // pred_fallthru
      _
    // Predicated region
    $region26: #{_prompt_aggr_jit.1} parent=1 // pred_check
      _
    $region27: #{_prompt_aggr_jit.1} parent=1 // pred_check_branch
      %44 = sbr.rel (0) target = $region29
    $region28: #{_prompt_aggr_jit.1} parent=1 // pred_region
      _
    $region29: #{_prompt_aggr_jit.1} parent=1 // pred_fallthru
      _
    // Predicated region
    $region30: #{_prompt_aggr_jit.1} parent=1 // pred_check
      _
    $region31: #{_prompt_aggr_jit.1} parent=1 // pred_check_branch
      %46 = sbr.rel (0) target = $region33
    $region32: #{_prompt_aggr_jit.1} parent=1 // pred_region
      _
    $region33: #{_prompt_aggr_jit.1} parent=1 // pred_fallthru
      _
    // Predicated region
    $region34: #{_prompt_aggr_jit.1} parent=1 // pred_check
      _
    $region35: #{_prompt_aggr_jit.1} parent=1 // pred_check_branch
      %48 = sbr.rel (0) target = $region37
    $region36: #{_prompt_aggr_jit.1} parent=1 // pred_region
      _
    $region37: #{_prompt_aggr_jit.1} parent=1 // pred_fallthru
      _
    // Predicated region
    $region38: #{_prompt_aggr_jit.1} parent=1 // pred_check
      _
    $region39: #{_prompt_aggr_jit.1} parent=1 // pred_check_branch
      %50 = sbr.rel (0) target = $region41
    $region40: #{_prompt_aggr_jit.1} parent=1 // pred_region
      _
    $region41: #{_prompt_aggr_jit.1} parent=1 // pred_fallthru
      _
    // Predicated region
    $region42: #{_prompt_aggr_jit.1} parent=1 // pred_check
      _
    $region43: #{_prompt_aggr_jit.1} parent=1 // pred_check_branch
      %52 = sbr.rel (0) target = $region45
    $region44: #{_prompt_aggr_jit.1} parent=1 // pred_region
      _
    $region45: #{_prompt_aggr_jit.1} parent=1 // pred_fallthru
      _
    // Predicated region
    $region46: #{_prompt_aggr_jit.1} parent=1 // pred_check
      _
    $region47: #{_prompt_aggr_jit.1} parent=1 // pred_check_branch
      %54 = sbr.rel (0) target = $region49
    $region48: #{_prompt_aggr_jit.1} parent=1 // pred_region
      _
    $region49: #{_prompt_aggr_jit.1} parent=1 // pred_fallthru
      _
    // Predicated region
    $region50: #{_prompt_aggr_jit.1} parent=1 // pred_check
      _
    $region51: #{_prompt_aggr_jit.1} parent=1 // pred_check_branch
      %56 = sbr.rel (0) target = $region53
    $region52: #{_prompt_aggr_jit.1} parent=1 // pred_region
      _
    $region53: #{_prompt_aggr_jit.1} parent=1 // pred_fallthru
      _
    // Predicated region
    $region54: #{_prompt_aggr_jit.1} parent=1 // pred_check
      _
    $region55: #{_prompt_aggr_jit.1} parent=1 // pred_check_branch
      %58 = sbr.rel (0) target = $region57
    $region56: #{_prompt_aggr_jit.1} parent=1 // pred_region
      _
    $region57: #{_prompt_aggr_jit.1} parent=1 // pred_fallthru
      _
    // Predicated region
    $region58: #{_prompt_aggr_jit.1} parent=1 // pred_check
      _
    $region59: #{_prompt_aggr_jit.1} parent=1 // pred_check_branch
      %60 = sbr.rel (0) target = $region61
    $region60: #{_prompt_aggr_jit.1} parent=1 // pred_region
      %61 = dma.done [#allocation3], 64
    $region61: #{_prompt_aggr_jit.1} parent=1 // pred_fallthru
      _
    %v65 = vld [vmem:[%s0] sm:$0xf]
    %v66 = vld [vmem:[%s0 + $0x4] sm:$0xf]
    %v67 = vld [vmem:[%s4] sm:$0xf]
    %v68 = vld [vmem:[%s4 + $0x4] sm:$0xf]
    %v69 = vld [vmem:[%s4 + $0x8] sm:$0xf]
    %v70 = vld [vmem:[%s4 + $0xc] sm:$0xf]
    %v71 = vld [vmem:[%s5] sm:$0x1]
    %v73 = vlaneseq
    %v74 = vshrl.u32 %v73, 7
    %v75 = vsub.s32 0, %v74
    %v76 = vrot.slane %v71, %v75
    %v80 = vunpack.c.l.b16 %v65
    %v81 = vunpack.c.l.b16 %v66
    %v82 = vpack.c.b16 %v81, %v80
    %v87 = vunpack.c.l.b16 %v67
    %v88 = vunpack.c.l.b16 %v68
    %v89 = vunpack.c.l.b16 %v69
    %v90 = vunpack.c.l.b16 %v70
    %v91 = vpack.c.b16 %v88, %v87
    %v92 = vpack.c.b16 %v90, %v89
    %vm95 = vcmask 261120
    %v97 = vsel %vm95, %v82, 0
    %99 = vmatprep.subr.bf16.mxu0 0
    %100 = vmatpush1.bf16.msra.mxu0 %v91
    %101 = vmatprep.subr.bf16.mxu0 0
    %102 = vmatpush1.bf16.msra.mxu0 %v92
    %103 = vmatprep.subr.bf16.mxu0 0
    %104 = vmatpush1.bf16.msra.mxu0 0
    %105 = vmatprep.subr.bf16.mxu0 0
    %106 = vmatpush1.bf16.msra.mxu0 0
    %107 = vmatprep.subr.bf16.mxu0 0
    %108 = vmatpush1.bf16.msra.mxu0 0
    %109 = vmatprep.subr.bf16.mxu0 0
    %110 = vmatpush1.bf16.msra.mxu0 0
    %111 = vmatprep.subr.bf16.mxu0 0
    %112 = vmatpush1.bf16.msra.mxu0 0
    %113 = vmatprep.subr.bf16.mxu0 0
    %114 = vmatpush1.bf16.msra.mxu0 0
    %115 = vmatprep.subr.bf16.mxu0 0
    %116 = vmatpush1.bf16.msra.mxu0 0
    %117 = vmatprep.subr.bf16.mxu0 0
    %118 = vmatpush1.bf16.msra.mxu0 0
    %119 = vmatprep.subr.bf16.mxu0 0
    %120 = vmatpush1.bf16.msra.mxu0 0
    %121 = vmatprep.subr.bf16.mxu0 0
    %122 = vmatpush1.bf16.msra.mxu0 0
    %123 = vmatprep.subr.bf16.mxu0 0
    %124 = vmatpush1.bf16.msra.mxu0 0
    %125 = vmatprep.subr.bf16.mxu0 0
    %126 = vmatpush1.bf16.msra.mxu0 0
    %127 = vmatprep.subr.bf16.mxu0 0
    %128 = vmatpush1.bf16.msra.mxu0 0
    %129 = vmatprep.subr.bf16.mxu0 0
    %130 = vmatpush1.bf16.msra.mxu0 0
    %131 = vmatprep.mubr.bf16.mxu0 0
    %132 = vmatmul.mubr.bf16.gmra.mrb[0].mxu0 %v97
    %v133 = vpop.f32.mrb[0].mxu0
    %v134 = vadd.f32 %v76, %v133
    %v135 = vpop.f32.mrb[0].mxu0
    %v136 = vpop.f32.mrb[0].mxu0
    %v137 = vadd.f32 %v76, %v136
    %v138 = vpop.f32.mrb[0].mxu0
    %139 = vdwg.mxu0
    %v140 = vmax.f32 %v134, 0.0
    %v141 = vmax.f32 %v137, 0.0
    %v142 = vpack.c.bf16 %v141, %v140
    %v143 = vld [vmem:[%s6] sm:$0xf]
    %v144 = vld [vmem:[%s6 + $0x4] sm:$0xf]
    %v145 = vld [vmem:[%s6 + $0x8] sm:$0xf]
    %v146 = vld [vmem:[%s6 + $0xc] sm:$0xf]
    %v147 = vld [vmem:[%s7] sm:$0x1]
    %v149 = vlaneseq
    %v150 = vshrl.u32 %v149, 7
    %v151 = vsub.s32 0, %v150
    %v152 = vrot.slane %v147, %v151
    %v158 = vunpack.c.l.b16 %v143
    %v159 = vunpack.c.l.b16 %v144
    %v160 = vunpack.c.l.b16 %v145
    %v161 = vunpack.c.l.b16 %v146
    %v162 = vpack.c.b16 %v159, %v158
    %v163 = vpack.c.b16 %v161, %v160
    %v167 = vsel %vm95, %v142, 0
    %169 = vmatprep.subr.bf16.mxu0 0
    %170 = vmatpush1.bf16.msra.mxu0 %v162
    %171 = vmatprep.subr.bf16.mxu0 0
    %172 = vmatpush1.bf16.msra.mxu0 %v163
    %173 = vmatprep.subr.bf16.mxu0 0
    %174 = vmatpush1.bf16.msra.mxu0 0
    %175 = vmatprep.subr.bf16.mxu0 0
    %176 = vmatpush1.bf16.msra.mxu0 0
    %177 = vmatprep.subr.bf16.mxu0 0
    %178 = vmatpush1.bf16.msra.mxu0 0
    %179 = vmatprep.subr.bf16.mxu0 0
    %180 = vmatpush1.bf16.msra.mxu0 0
    %181 = vmatprep.subr.bf16.mxu0 0
    %182 = vmatpush1.bf16.msra.mxu0 0
    %183 = vmatprep.subr.bf16.mxu0 0
    %184 = vmatpush1.bf16.msra.mxu0 0
    %185 = vmatprep.subr.bf16.mxu0 0
    %186 = vmatpush1.bf16.msra.mxu0 0
    %187 = vmatprep.subr.bf16.mxu0 0
    %188 = vmatpush1.bf16.msra.mxu0 0
    %189 = vmatprep.subr.bf16.mxu0 0
    %190 = vmatpush1.bf16.msra.mxu0 0
    %191 = vmatprep.subr.bf16.mxu0 0
    %192 = vmatpush1.bf16.msra.mxu0 0
    %193 = vmatprep.subr.bf16.mxu0 0
    %194 = vmatpush1.bf16.msra.mxu0 0
    %195 = vmatprep.subr.bf16.mxu0 0
    %196 = vmatpush1.bf16.msra.mxu0 0
    %197 = vmatprep.subr.bf16.mxu0 0
    %198 = vmatpush1.bf16.msra.mxu0 0
    %199 = vmatprep.subr.bf16.mxu0 0
    %200 = vmatpush1.bf16.msra.mxu0 0
    %201 = vmatprep.mubr.bf16.mxu0 0
    %202 = vmatmul.mubr.bf16.gmra.mrb[0].mxu0 %v167
    %v203 = vpop.f32.mrb[0].mxu0
    %v204 = vadd.f32 %v152, %v203
    %v205 = vpop.f32.mrb[0].mxu0
    %v206 = vpop.f32.mrb[0].mxu0
    %v207 = vadd.f32 %v152, %v206
    %v208 = vpop.f32.mrb[0].mxu0
    %209 = vdwg.mxu0
    %v210 = vpack.c.bf16 %v207, %v204
    %v211 = vld [vmem:[%s8] sm:$0xf]
    %v212 = vld [vmem:[%s8 + $0x4] sm:$0xf]
    %v213 = vld [vmem:[%s8 + $0x8] sm:$0xf]
    %v214 = vld [vmem:[%s8 + $0xc] sm:$0xf]
    %v215 = vld [vmem:[%s9] sm:$0x1]
    %v217 = vlaneseq
    %v218 = vshrl.u32 %v217, 7
    %v219 = vsub.s32 0, %v218
    %v220 = vrot.slane %v215, %v219
    %v226 = vunpack.c.l.b16 %v211
    %v227 = vunpack.c.l.b16 %v212
    %v228 = vunpack.c.l.b16 %v213
    %v229 = vunpack.c.l.b16 %v214
    %v230 = vpack.c.b16 %v227, %v226
    %v231 = vpack.c.b16 %v229, %v228
    %v235 = vsel %vm95, %v210, 0
    %237 = vmatprep.subr.bf16.mxu0 0
    %238 = vmatpush1.bf16.msra.mxu0 %v230
    %239 = vmatprep.subr.bf16.mxu0 0
    %240 = vmatpush1.bf16.msra.mxu0 %v231
    %241 = vmatprep.subr.bf16.mxu0 0
    %242 = vmatpush1.bf16.msra.mxu0 0
    %243 = vmatprep.subr.bf16.mxu0 0
    %244 = vmatpush1.bf16.msra.mxu0 0
    %245 = vmatprep.subr.bf16.mxu0 0
    %246 = vmatpush1.bf16.msra.mxu0 0
    %247 = vmatprep.subr.bf16.mxu0 0
    %248 = vmatpush1.bf16.msra.mxu0 0
    %249 = vmatprep.subr.bf16.mxu0 0
    %250 = vmatpush1.bf16.msra.mxu0 0
    %251 = vmatprep.subr.bf16.mxu0 0
    %252 = vmatpush1.bf16.msra.mxu0 0
    %253 = vmatprep.subr.bf16.mxu0 0
    %254 = vmatpush1.bf16.msra.mxu0 0
    %255 = vmatprep.subr.bf16.mxu0 0
    %256 = vmatpush1.bf16.msra.mxu0 0
    %257 = vmatprep.subr.bf16.mxu0 0
    %258 = vmatpush1.bf16.msra.mxu0 0
    %259 = vmatprep.subr.bf16.mxu0 0
    %260 = vmatpush1.bf16.msra.mxu0 0
    %261 = vmatprep.subr.bf16.mxu0 0
    %262 = vmatpush1.bf16.msra.mxu0 0
    %263 = vmatprep.subr.bf16.mxu0 0
    %264 = vmatpush1.bf16.msra.mxu0 0
    %265 = vmatprep.subr.bf16.mxu0 0
    %266 = vmatpush1.bf16.msra.mxu0 0
    %267 = vmatprep.subr.bf16.mxu0 0
    %268 = vmatpush1.bf16.msra.mxu0 0
    %269 = vmatprep.mubr.bf16.mxu0 0
    %270 = vmatmul.mubr.bf16.gmra.mrb[0].mxu0 %v235
    %v271 = vpop.f32.mrb[0].mxu0
    %v272 = vadd.f32 %v220, %v271
    %v273 = vpop.f32.mrb[0].mxu0
    %v274 = vpop.f32.mrb[0].mxu0
    %v275 = vadd.f32 %v220, %v274
    %v276 = vpop.f32.mrb[0].mxu0
    %277 = vdwg.mxu0
    %v278 = vld [vmem:[%s2] sm:$0xf]
    %v279 = vld [vmem:[%s2 + $0x4] sm:$0xf]
    %v280 = vld [vmem:[%s2 + $0x8] sm:$0xf]
    %v281 = vld [vmem:[%s2 + $0xc] sm:$0xf]
    %v286 = vunpack.c.l.b16 %v278
    %v287 = vunpack.c.l.b16 %v279
    %v288 = vunpack.c.l.b16 %v280
    %v289 = vunpack.c.l.b16 %v281
    %v290 = vpack.c.b16 %v287, %v286
    %v291 = vpack.c.b16 %v289, %v288
    %294 = vmatprep.subr.bf16.mxu0 0
    %295 = vmatpush1.bf16.msra.mxu0 %v290
    %296 = vmatprep.subr.bf16.mxu0 0
    %297 = vmatpush1.bf16.msra.mxu0 %v291
    %298 = vmatprep.subr.bf16.mxu0 0
    %299 = vmatpush1.bf16.msra.mxu0 0
    %300 = vmatprep.subr.bf16.mxu0 0
    %301 = vmatpush1.bf16.msra.mxu0 0
    %302 = vmatprep.subr.bf16.mxu0 0
    %303 = vmatpush1.bf16.msra.mxu0 0
    %304 = vmatprep.subr.bf16.mxu0 0
    %305 = vmatpush1.bf16.msra.mxu0 0
    %306 = vmatprep.subr.bf16.mxu0 0
    %307 = vmatpush1.bf16.msra.mxu0 0
    %308 = vmatprep.subr.bf16.mxu0 0
    %309 = vmatpush1.bf16.msra.mxu0 0
    %310 = vmatprep.subr.bf16.mxu0 0
    %311 = vmatpush1.bf16.msra.mxu0 0
    %312 = vmatprep.subr.bf16.mxu0 0
    %313 = vmatpush1.bf16.msra.mxu0 0
    %314 = vmatprep.subr.bf16.mxu0 0
    %315 = vmatpush1.bf16.msra.mxu0 0
    %316 = vmatprep.subr.bf16.mxu0 0
    %317 = vmatpush1.bf16.msra.mxu0 0
    %318 = vmatprep.subr.bf16.mxu0 0
    %319 = vmatpush1.bf16.msra.mxu0 0
    %320 = vmatprep.subr.bf16.mxu0 0
    %321 = vmatpush1.bf16.msra.mxu0 0
    %322 = vmatprep.subr.bf16.mxu0 0
    %323 = vmatpush1.bf16.msra.mxu0 0
    %324 = vmatprep.subr.bf16.mxu0 0
    %325 = vmatpush1.bf16.msra.mxu0 0
    %326 = vmatprep.mubr.bf16.mxu0 0
    %327 = vmatmul.mubr.bf16.gmra.mrb[0].mxu0 %v235
    %v328 = vpop.f32.mrb[0].mxu0
    %v329 = vadd.f32 0.0, %v328
    %v330 = vpop.f32.mrb[0].mxu0
    %v331 = vpop.f32.mrb[0].mxu0
    %v332 = vadd.f32 0.0, %v331
    %v333 = vpop.f32.mrb[0].mxu0
    %334 = vdwg.mxu0
    %v335 = vld [vmem:[%s1] sm:$0xf]
    %v336 = vld [vmem:[%s1 + $0x4] sm:$0xf]
    %vm337 = vcmp.gt.bf16.partialorder %v335, 0
    %vm338 = vcmp.gt.bf16.partialorder %v336, 0
    %v339 = vsel %vm337, 65537, 0
    %v340 = vsel %vm338, 65537, 0
    %v341 = vunpack.c.l.b16 %v339
    %v342 = vunpack.c.l.b16 %v340
    %vm343 = vcmp.ne.s32.totalorder %v341, 0
    %vm344 = vcmp.ne.s32.totalorder %v342, 0
    %v345 = vsel %vm343, 1, 0
    %v346 = vsel %vm344, 1, 0
    %347 = vset.pattern.permute.xlu0 0
    %348 = vperm.xlu0 %347, %v345
    %v349 = vpop.permute.xlu0 %348
    %350 = vset.pattern.permute.xlu0 0
    %351 = vperm.xlu0 %350, %v346
    %v352 = vpop.permute.xlu0 %351
    %vm353 = vcmp.eq.s32.totalorder %v349, 1
    %vm354 = vcmp.eq.s32.totalorder %v352, 1
    %v355 = vsel %vm353, %v329, -inf
    %v356 = vsel %vm354, %v332, -inf
    %vm357 = vcmask 31744
    %v358 = vsel %vm357, %v355, -inf
    %v359 = vrot.slane %v358, 4
    %v360 = vmax.f32 %v358, %v359
    %v361 = vrot.slane %v360, 2
    %v362 = vmax.f32 %v360, %v361
    %v363 = vrot.slane %v362, 1
    %v364 = vmax.f32 %v362, %v363
    %v365 = vsel %vm357, %v356, -inf
    %v366 = vrot.slane %v365, 4
    %v367 = vmax.f32 %v365, %v366
    %v368 = vrot.slane %v367, 2
    %v369 = vmax.f32 %v367, %v368
    %v370 = vrot.slane %v369, 1
    %v371 = vmax.f32 %v369, %v370
    %v372 = vsub.f32 %v355, %v364
    %v373 = vsub.f32 %v356, %v371
    %v374 = vmul.f32 %v372, 1.442695
    %v375 = vpow.pop %v374
    %v376 = vmul.f32 %v373, 1.442695
    %v377 = vpow.pop %v376
    %v378 = vsel %vm357, %v375, 0.0
    %v379 = vrot.slane %v378, 4
    %v380 = vadd.f32 %v378, %v379
    %v381 = vrot.slane %v380, 2
    %v382 = vadd.f32 %v380, %v381
    %v383 = vrot.slane %v382, 1
    %v384 = vadd.f32 %v382, %v383
    %v385 = vsel %vm357, %v377, 0.0
    %v386 = vrot.slane %v385, 4
    %v387 = vadd.f32 %v385, %v386
    %v388 = vrot.slane %v387, 2
    %v389 = vadd.f32 %v387, %v388
    %v390 = vrot.slane %v389, 1
    %v391 = vadd.f32 %v389, %v390
    %v392 = vrcp.pop %v384
    %v393 = vrcp.pop %v391
    %v394 = vmul.f32 %v375, %v392
    %v395 = vmul.f32 %v377, %v393
    %vm396 = vcmask 7168
    %397 = vst.msk [vmem:[%s15] sm:$0xff] %vm396, %v394
    %398 = vst.msk [vmem:[%s15 + $0x8] sm:$0xff] %vm396, %v395
    %v399 = vld [vmem:[#allocation2] sm:$0xf]
    %v401 = vsel %vm357, %v394, 0
    %v404 = vsel %vm357, %v395, 0
    %vm406 = vcmask 1043456
    %v408 = vsel %vm406, %v399, 0
    %410 = vmatprep.subr.mxu0 0.0
    %411 = vmatpush1.msra.mxu0 %v408
    %412 = vmatprep.subr.mxu0 0.0
    %413 = vmatpush1.msra.mxu0 0.0
    %414 = vmatprep.subr.mxu0 0.0
    %415 = vmatpush1.msra.mxu0 0.0
    %416 = vmatprep.subr.mxu0 0.0
    %417 = vmatpush1.msra.mxu0 0.0
    %418 = vmatprep.subr.mxu0 0.0
    %419 = vmatpush1.msra.mxu0 0.0
    %420 = vmatprep.subr.mxu0 0.0
    %421 = vmatpush1.msra.mxu0 0.0
    %422 = vmatprep.subr.mxu0 0.0
    %423 = vmatpush1.msra.mxu0 0.0
    %424 = vmatprep.subr.mxu0 0.0
    %425 = vmatpush1.msra.mxu0 0.0
    %426 = vmatprep.subr.mxu0 0.0
    %427 = vmatpush1.msra.mxu0 0.0
    %428 = vmatprep.subr.mxu0 0.0
    %429 = vmatpush1.msra.mxu0 0.0
    %430 = vmatprep.subr.mxu0 0.0
    %431 = vmatpush1.msra.mxu0 0.0
    %432 = vmatprep.subr.mxu0 0.0
    %433 = vmatpush1.msra.mxu0 0.0
    %434 = vmatprep.subr.mxu0 0.0
    %435 = vmatpush1.msra.mxu0 0.0
    %436 = vmatprep.subr.mxu0 0.0
    %437 = vmatpush1.msra.mxu0 0.0
    %438 = vmatprep.subr.mxu0 0.0
    %439 = vmatpush1.msra.mxu0 0.0
    %440 = vmatprep.subr.mxu0 0.0
    %441 = vmatpush1.msra.mxu0 0.0
    %442 = vmatprep.subr.mxu0 0.0
    %443 = vmatpush1.msra.mxu0 0.0
    %444 = vmatprep.subr.mxu0 0.0
    %445 = vmatpush1.msra.mxu0 0.0
    %446 = vmatprep.subr.mxu0 0.0
    %447 = vmatpush1.msra.mxu0 0.0
    %448 = vmatprep.subr.mxu0 0.0
    %449 = vmatpush1.msra.mxu0 0.0
    %450 = vmatprep.subr.mxu0 0.0
    %451 = vmatpush1.msra.mxu0 0.0
    %452 = vmatprep.subr.mxu0 0.0
    %453 = vmatpush1.msra.mxu0 0.0
    %454 = vmatprep.subr.mxu0 0.0
    %455 = vmatpush1.msra.mxu0 0.0
    %456 = vmatprep.subr.mxu0 0.0
    %457 = vmatpush1.msra.mxu0 0.0
    %458 = vmatprep.subr.mxu0 0.0
    %459 = vmatpush1.msra.mxu0 0.0
    %460 = vmatprep.subr.mxu0 0.0
    %461 = vmatpush1.msra.mxu0 0.0
    %462 = vmatprep.subr.mxu0 0.0
    %463 = vmatpush1.msra.mxu0 0.0
    %464 = vmatprep.subr.mxu0 0.0
    %465 = vmatpush1.msra.mxu0 0.0
    %466 = vmatprep.subr.mxu0 0.0
    %467 = vmatpush1.msra.mxu0 0.0
    %468 = vmatprep.subr.mxu0 0.0
    %469 = vmatpush1.msra.mxu0 0.0
    %470 = vmatprep.subr.mxu0 0.0
    %471 = vmatpush1.msra.mxu0 0.0
    %472 = vmatprep.subr.mxu0 0.0
    %473 = vmatpush1.msra.mxu0 0.0
    %474 = vmatprep.mubr.f32.mxu0 0.0
    %475 = vmatmul.mubr.f32.gmra.mrb[0].mxu0 %v401
    %v476 = vpop.f32.mrb[0].mxu0
    %v477 = vadd.f32 0.0, %v476
    %v478 = vpop.f32.mrb[0].mxu0
    %479 = vmatprep.mubr.f32.mxu0 0.0
    %480 = vmatmul.mubr.f32.gmra.mrb[0].mxu0 %v404
    %v481 = vpop.f32.mrb[0].mxu0
    %v482 = vadd.f32 0.0, %v481
    %v483 = vpop.f32.mrb[0].mxu0
    %484 = vdwg.mxu0
    %v485 = vmul.f32 %v477, %v272
    %v486 = vmul.f32 %v482, %v275
    %v487 = vsel %vm95, %v485, 0.0
    %v488 = vrot.slane %v487, 4
    %v489 = vadd.f32 %v487, %v488
    %v490 = vrot.slane %v489, 2
    %v491 = vadd.f32 %v489, %v490
    %v492 = vrot.slane %v491, 1
    %v493 = vadd.f32 %v491, %v492
    %v494 = vsel %vm95, %v486, 0.0
    %v495 = vrot.slane %v494, 4
    %v496 = vadd.f32 %v494, %v495
    %v497 = vrot.slane %v496, 2
    %v498 = vadd.f32 %v496, %v497
    %v499 = vrot.slane %v498, 1
    %v500 = vadd.f32 %v498, %v499
    %v501 = vpack.c.bf16 %v493, %v493
    %v502 = vpack.c.bf16 %v500, %v500
    %v503 = vld [vmem:[%s10] sm:$0xf]
    %v504 = vld [vmem:[%s10 + $0x4] sm:$0xf]
    %v505 = vld [vmem:[%s10 + $0x8] sm:$0xf]
    %v506 = vld [vmem:[%s10 + $0xc] sm:$0xf]
    %v507 = vld [vmem:[%s11] sm:$0x1]
    %v509 = vlaneseq
    %v510 = vshrl.u32 %v509, 7
    %v511 = vsub.s32 0, %v510
    %v512 = vrot.slane %v507, %v511
    %v516 = vunpack.c.l.b16 %v501
    %v517 = vunpack.c.l.b16 %v502
    %vm518 = vcmask 1041409
    %v519 = vsel %vm518, %v517, %v516
    %v520 = vpack.c.b16 %v519, %v519
    %v525 = vunpack.c.l.b16 %v503
    %v526 = vunpack.c.l.b16 %v504
    %v527 = vunpack.c.l.b16 %v505
    %v528 = vunpack.c.l.b16 %v506
    %v529 = vpack.c.b16 %v526, %v525
    %v530 = vpack.c.b16 %v528, %v527
    %v534 = vsel %vm95, %v520, 0
    %536 = vmatprep.subr.bf16.mxu0 0
    %537 = vmatpush1.bf16.msra.mxu0 %v529
    %538 = vmatprep.subr.bf16.mxu0 0
    %539 = vmatpush1.bf16.msra.mxu0 %v530
    %540 = vmatprep.subr.bf16.mxu0 0
    %541 = vmatpush1.bf16.msra.mxu0 0
    %542 = vmatprep.subr.bf16.mxu0 0
    %543 = vmatpush1.bf16.msra.mxu0 0
    %544 = vmatprep.subr.bf16.mxu0 0
    %545 = vmatpush1.bf16.msra.mxu0 0
    %546 = vmatprep.subr.bf16.mxu0 0
    %547 = vmatpush1.bf16.msra.mxu0 0
    %548 = vmatprep.subr.bf16.mxu0 0
    %549 = vmatpush1.bf16.msra.mxu0 0
    %550 = vmatprep.subr.bf16.mxu0 0
    %551 = vmatpush1.bf16.msra.mxu0 0
    %552 = vmatprep.subr.bf16.mxu0 0
    %553 = vmatpush1.bf16.msra.mxu0 0
    %554 = vmatprep.subr.bf16.mxu0 0
    %555 = vmatpush1.bf16.msra.mxu0 0
    %556 = vmatprep.subr.bf16.mxu0 0
    %557 = vmatpush1.bf16.msra.mxu0 0
    %558 = vmatprep.subr.bf16.mxu0 0
    %559 = vmatpush1.bf16.msra.mxu0 0
    %560 = vmatprep.subr.bf16.mxu0 0
    %561 = vmatpush1.bf16.msra.mxu0 0
    %562 = vmatprep.subr.bf16.mxu0 0
    %563 = vmatpush1.bf16.msra.mxu0 0
    %564 = vmatprep.subr.bf16.mxu0 0
    %565 = vmatpush1.bf16.msra.mxu0 0
    %566 = vmatprep.subr.bf16.mxu0 0
    %567 = vmatpush1.bf16.msra.mxu0 0
    %568 = vmatprep.mubr.bf16.mxu0 0
    %569 = vmatmul.mubr.bf16.gmra.mrb[0].mxu0 %v534
    %v570 = vpop.f32.mrb[0].mxu0
    %v571 = vadd.f32 %v512, %v570
    %v572 = vpop.f32.mrb[0].mxu0
    %v573 = vpop.f32.mrb[0].mxu0
    %v574 = vpop.f32.mrb[0].mxu0
    %575 = vdwg.mxu0
    %vm576 = vcmask 254976
    %v577 = vsel %vm576, %v571, 0.0
    %578 = vadd.xlane.f32.xlu0 %v577
    %v579 = vpop.xlane.xlu0 %578
    %v580 = vrcp.pop 32.0
    %v581 = vmul.f32 %v579, %v580
    %v582 = vsub.f32 %v571, %v581
    %v583 = vmul.f32 %v582, %v582
    %v584 = vsel %vm576, %v583, 0.0
    %585 = vadd.xlane.f32.xlu0 %v584
    %v586 = vpop.xlane.xlu0 %585
    %v587 = vmul.f32 %v586, %v580
    %v588 = vadd.f32 %v587, 1e-05
    %v589 = vrsqrt.pop %v588
    %v590 = vmul.f32 %v582, %v589
    %v591 = vld [vmem:[%s12] sm:$0x1]
    %v593 = vlaneseq
    %v594 = vshrl.u32 %v593, 7
    %v595 = vsub.s32 0, %v594
    %v596 = vrot.slane %v591, %v595
    %v598 = vmul.f32 %v590, %v596
    %v599 = vld [vmem:[%s13] sm:$0x1]
    %v601 = vlaneseq
    %v602 = vshrl.u32 %v601, 7
    %v603 = vsub.s32 0, %v602
    %v604 = vrot.slane %v599, %v603
    %v606 = vadd.f32 %v598, %v604
    %607 = vst.msk [vmem:[#allocation5] sm:$0x3] %vm576, %v606
    // Predicated region
    $region62: #{_prompt_aggr_jit.1} parent=1 // pred_check
      _
    $region63: #{_prompt_aggr_jit.1} parent=1 // pred_check_branch
      %609 = sbr.rel (0) target = $region65
    $region64: #{_prompt_aggr_jit.1} parent=1 // pred_region
      %s611 = ssub.s32 32, 32
      %612 = vsyncadd [#allocation4], %s611
      %s614 = sshll.u32 [#allocation5], 4
      %s615 = int_to_ptr.vmem [resolvable:$true] %s614
      %617 = dma.vmem_to_hbm [thread:$0]  %s615, 32, %s14, [#allocation4]
    $region65: #{_prompt_aggr_jit.1} parent=1 // pred_fallthru
      _
    // Predicated region
    $region66: #{_prompt_aggr_jit.1} parent=1 // pred_check
      _
    $region67: #{_prompt_aggr_jit.1} parent=1 // pred_check_branch
      %619 = sbr.rel (0) target = $region69
    $region68: #{_prompt_aggr_jit.1} parent=1 // pred_region
      _
    $region69: #{_prompt_aggr_jit.1} parent=1 // pred_fallthru
      _
    // Predicated region
    $region70: #{_prompt_aggr_jit.1} parent=1 // pred_check
      _
    $region71: #{_prompt_aggr_jit.1} parent=1 // pred_check_branch
      %621 = sbr.rel (0) target = $region73
    $region72: #{_prompt_aggr_jit.1} parent=1 // pred_region
      %622 = dma.done [#allocation4], 32
    $region73: #{_prompt_aggr_jit.1} parent=1 // pred_fallthru
      _
    // Predicated region
    $region74: #{_prompt_aggr_jit.1} parent=1 // pred_check
      _
    $region75: #{_prompt_aggr_jit.1} parent=1 // pred_check_branch
      %624 = sbr.rel (0) target = $region77
    $region76: #{_prompt_aggr_jit.1} parent=1 // pred_region
      _
    $region77: #{_prompt_aggr_jit.1} parent=1 // pred_fallthru
      _
    %625 = vsyncpa [#allocation3], 1
    %626 = vsyncpa [#allocation4], 1

</llo_original>
